<compile_context>
chip_gen: v7x
topology: tpu7x:2x2x1
jax: 0.10.0
libtpu: 0.0.40
codegen_flags: <defaults>
</compile_context>

<pallas_src>
import functools

import jax
import jax.numpy as jnp
from jax.experimental import pallas as pl
from jax.experimental.pallas import tpu as pltpu


def _embed_kernel(ids_ref, table_ref, out_ref, *, vocab):
    ids = ids_ref[...]                                        # (TILE_N, 1) int32
    tile_n = ids.shape[0]
    col = jax.lax.broadcasted_iota(jnp.int32, (tile_n, vocab), 1)
    one_hot = (col == ids).astype(table_ref.dtype)            # (TILE_N, V)
    out = jnp.dot(one_hot, table_ref[...],                    # MXU gather
                  preferred_element_type=jnp.float32)         # (TILE_N, D)
    out_ref[...] = out.astype(out_ref.dtype)


def _embed_dropout_kernel(ids_ref, table_ref, u_ref, out_ref, *,
                          vocab, dropout_prob):
    ids = ids_ref[...]                                        # (TILE_N, 1) int32
    tile_n = ids.shape[0]
    col = jax.lax.broadcasted_iota(jnp.int32, (tile_n, vocab), 1)
    one_hot = (col == ids).astype(table_ref.dtype)            # (TILE_N, V)
    out = jnp.dot(one_hot, table_ref[...],
                  preferred_element_type=jnp.float32)         # (TILE_N, D)
    # Inverted dropout: keep with prob (1-p), scale kept values by 1/(1-p).
    inv_keep = 1.0 / (1.0 - dropout_prob)
    keep = u_ref[...] >= dropout_prob                         # (TILE_N, D) bool
    out = jnp.where(keep, out * inv_keep, 0.0)
    out_ref[...] = out.astype(out_ref.dtype)


def word_encoder_forward(input_word, embedding_table, *, dropout_prob=0.0,
                         train=False, rng_key=None, tile_n=128):
    """input_word: (B, S) int32; embedding_table: (V, D) -> (B, S, D)."""
    B, S = input_word.shape
    V, D = embedding_table.shape
    N = B * S

    tile_n = max(8, int(tile_n))
    n_blocks = pl.cdiv(N, tile_n)
    n_pad = n_blocks * tile_n

    # Flatten, clamp (safety for the in-kernel gather) and pad ids so every
    # block is exactly (tile_n, 1); padding tokens point at row 0.
    ids = jnp.clip(input_word.reshape(N).astype(jnp.int32), 0, V - 1)
    if n_pad != N:
        ids = jnp.pad(ids, (0, n_pad - N))
    ids2d = ids.reshape(n_pad, 1)

    apply_dropout = bool(train) and float(dropout_prob) > 0.0

    table_bytes = V * D * embedding_table.dtype.itemsize
    # TODO(synk): very large vocabularies (> ~24 MiB, the safe v7x budget)
    # would need the table tiled over V with partial one-hot matmuls instead
    # of full VMEM residency.
    assert table_bytes <= 24 * 1024 * 1024, (
        "embedding table too large for the VMEM-resident gather strategy")

    out_block_bytes = tile_n * D * embedding_table.dtype.itemsize
    vmem_limit = int(2 * table_bytes              # table (double-buffered)
                     + 2 * out_block_bytes        # output double-buffer
                     + 2 * tile_n * 4             # ids double-buffer
                     + (2 * tile_n * D * 4 if apply_dropout else 0)
                     + (4 << 20))                 # temporaries / slack

    in_specs = [
        pl.BlockSpec((tile_n, 1), lambda i: (i, 0)),   # ids block
        pl.BlockSpec((V, D), lambda i: (0, 0)),        # full table, resident
    ]
    args = [ids2d, embedding_table]

    if apply_dropout:
        if rng_key is None:
            rng_key = jax.random.PRNGKey(0)
        # Uniform [0, 1) per output element; drawn once, streamed per block.
        u = jax.random.uniform(rng_key, (n_pad, D), dtype=jnp.float32)
        in_specs.append(pl.BlockSpec((tile_n, D), lambda i: (i, 0)))
        args.append(u)
        kernel = functools.partial(_embed_dropout_kernel, vocab=V,
                                   dropout_prob=float(dropout_prob))
    else:
        kernel = functools.partial(_embed_kernel, vocab=V)

    out = pl.pallas_call(
        kernel,
        out_shape=jax.ShapeDtypeStruct((n_pad, D), embedding_table.dtype),
        grid=(n_blocks,),
        in_specs=in_specs,
        out_specs=pl.BlockSpec((tile_n, D), lambda i: (i, 0)),
        compiler_params=pltpu.CompilerParams(
            dimension_semantics=("parallel",),
            vmem_limit_bytes=vmem_limit),
    )(*args)

    return out[:N].reshape(B, S, D)


if __name__ == "__main__":
    # Synthetic word_config (mirrors the nn.Module __init__ shapes).
    word_count = 32      # vocab size V
    word_dim = 128       # embedding dim D
    padding_idx = 0
    dropout_prob = 0.1

    B, S = 2, 8

    key = jax.random.PRNGKey(0)
    k_tab, k_ids, k_drop = jax.random.split(key, 3)

    # nn.Embedding init (N(0,1)) with the padding row zeroed, as PyTorch does.
    table = jax.random.normal(k_tab, (word_count, word_dim), dtype=jnp.float32)
    table = table.at[padding_idx].set(0.0)

    input_word = jax.random.randint(k_ids, (B, S), 0, word_count,
                                    dtype=jnp.int32)

    # Eval-mode forward (dropout = identity), matching module.eval().
    out = word_encoder_forward(input_word, table,
                               dropout_prob=dropout_prob, train=False)
    out = jax.block_until_ready(out)

    ref = jnp.take(table, input_word, axis=0)
    assert out.shape == (B, S, word_dim)
    assert jnp.allclose(out, ref, atol=1e-6)

    # Train-mode forward (inverted dropout).  Each output element must be
    # either 0 (dropped) or ref / (1 - p) (kept & rescaled).
    out_train = jax.block_until_ready(
        word_encoder_forward(input_word, table, dropout_prob=dropout_prob,
                             train=True, rng_key=k_drop))
    assert out_train.shape == (B, S, word_dim)
    kept = ref / (1.0 - dropout_prob)
    ok = jnp.isclose(out_train, 0.0, atol=1e-6) | jnp.isclose(
        out_train, kept, atol=1e-5)
    assert bool(jnp.all(ok))

    print("KERNEL_OK")
</pallas_src>

<mosaic_0001>
module attributes {stable_mosaic.version = 11 : i64} {
  func.func @_embed_kernel(%arg0: i32, %arg1: memref<128x1xi32, #tpu.memory_space<vmem>>, %arg2: memref<32x128xf32, #tpu.memory_space<vmem>>, %arg3: memref<128x128xf32, #tpu.memory_space<vmem>>) attributes {dimension_semantics = [#tpu.dimension_semantics<parallel>], iteration_bounds = array<i64: 1>, scalar_prefetch = 0 : i64, scratch_operands = 0 : i64, tpu.core_type = #tpu.core_type<tc>, window_params = [{transform_indices = @transform_0, window_bounds = array<i64: 128, 1>}, {pipeline_mode = #tpu.pipeline_mode<synchronous>, transform_indices = @transform_1, window_bounds = array<i64: 32, 128>}, {transform_indices = @transform_2, window_bounds = array<i64: 128, 128>}]} {
    %c0 = arith.constant 0 : index
    %c0_0 = arith.constant 0 : index
    %0 = vector.load %arg1[%c0, %c0_0] : memref<128x1xi32, #tpu.memory_space<vmem>>, vector<128x1xi32>
    %1 = tpu.iota {dimensions = array<i32: 1>} : vector<128x32xi32>
    %2 = vector.broadcast %0 : vector<128x1xi32> to vector<128x32xi32>
    %3 = arith.cmpi eq, %1, %2 : vector<128x32xi32>
    %4 = arith.extui %3 : vector<128x32xi1> to vector<128x32xi32>
    %5 = arith.sitofp %4 : vector<128x32xi32> to vector<128x32xf32>
    %c0_1 = arith.constant 0 : index
    %c0_2 = arith.constant 0 : index
    %6 = vector.load %arg2[%c0_1, %c0_2] : memref<32x128xf32, #tpu.memory_space<vmem>>, vector<32x128xf32>
    %cst = arith.constant dense<0.000000e+00> : vector<128x128xf32>
    %7 = tpu.matmul %5, %6, %cst {dimension_numbers = #tpu.dot_dimension_numbers<[1], [0], [0], [1], [0, 0, 1, 1], [], []>} : vector<128x32xf32>, vector<32x128xf32>, vector<128x128xf32> -> vector<128x128xf32>
    %c0_3 = arith.constant 0 : index
    %c0_4 = arith.constant 0 : index
    %8 = vector.load %arg3[%c0_3, %c0_4] : memref<128x128xf32, #tpu.memory_space<vmem>>, vector<128x128xf32>
    tpu.vector_store %arg3[%c0_3, %c0_4], %7 {strides = array<i32>} : memref<128x128xf32, #tpu.memory_space<vmem>>, vector<128x128xf32>,
    return
  }
  func.func @transform_0(%arg0: i32) -> (i32, i32) {
    %c0_i32 = arith.constant 0 : i32
    %c0_i32_0 = arith.constant 0 : i32
    return %arg0, %c0_i32 : i32, i32
  }
  func.func @transform_1(%arg0: i32) -> (i32, i32) {
    %c0_i32 = arith.constant 0 : i32
    %c0_i32_0 = arith.constant 0 : i32
    %c0_i32_1 = arith.constant 0 : i32
    return %c0_i32, %c0_i32_0 : i32, i32
  }
  func.func @transform_2(%arg0: i32) -> (i32, i32) {
    %c0_i32 = arith.constant 0 : i32
    %c0_i32_0 = arith.constant 0 : i32
    return %arg0, %c0_i32 : i32, i32
  }
}

</mosaic_0001>

<llo_original>
// kernel: tpu_custom_call.1
$region0: #{tpu_custom_call.1}
  #allocation0 [shape = 'u32[]', space=smem, size = 0x4, offset = 0x4, fixed_abs, tag = 'smem constant byte address 0x4 - core index']
  #allocation1 [shape = 'u32[144,128]{1,0:T(1,128)}', space=vmem, size = 0x12000, scoped, tag = 'internal scratch']
  %s0 = inlined_call_operand.vmem [shape: s32[128,1], index: 0, kind: input, shape index: {}]
  %s1 = inlined_call_operand.vmem [shape: f32[32,128], index: 1, kind: input, shape index: {}]
  %s2 = inlined_call_operand.hbm [shape: f32[128,128], index: 2, kind: output, shape index: {}]
  %s3 = sld [smem:[#allocation0]]
  $region18: #{tpu_custom_call.1} parent=0
    _
  %s5 = ssub.s32 1, %s3
  %s6 = scalar_select 0, %s5, %s3
  $region1: #{tpu_custom_call.1} parent=0
    #allocation2 [shape = 'u8[65536]{0}', space=vmem, size = 0x10000, scoped, tag = 'output window, operand 0, single buffered']
    #allocation3 [shape = 's32[1]{0}', space=sflag, size = 0x4, scoped, tag = 'scoped memory for tpu_custom_call.1']
    %7 = vsyncpa [#allocation3], 0
    // Predicated region
    $region2: #{tpu_custom_call.1} parent=1 // pred_check
      _
    $region3: #{tpu_custom_call.1} parent=1 // pred_check_branch
      %9 = sbr.rel (0) target = $region5
    $region4: #{tpu_custom_call.1} parent=1 // pred_region
      _
    $region5: #{tpu_custom_call.1} parent=1 // pred_fallthru
      _
    // Predicated region
    $region6: #{tpu_custom_call.1} parent=1 // pred_check
      _
    $region7: #{tpu_custom_call.1} parent=1 // pred_check_branch
      %11 = sbr.rel (0) target = $region9
    $region8: #{tpu_custom_call.1} parent=1 // pred_region
      _
    $region9: #{tpu_custom_call.1} parent=1 // pred_fallthru
      _
    %v12 = vld [vmem:[%s0] sm:$0xff]
    %v13 = vld [vmem:[%s0 + $0x8] sm:$0xff]
    %v14 = vld [vmem:[%s0 + $0x10] sm:$0xff]
    %v15 = vld [vmem:[%s0 + $0x18] sm:$0xff]
    %v16 = vld [vmem:[%s0 + $0x20] sm:$0xff]
    %v17 = vld [vmem:[%s0 + $0x28] sm:$0xff]
    %v18 = vld [vmem:[%s0 + $0x30] sm:$0xff]
    %v19 = vld [vmem:[%s0 + $0x38] sm:$0xff]
    %v20 = vld [vmem:[%s0 + $0x40] sm:$0xff]
    %v21 = vld [vmem:[%s0 + $0x48] sm:$0xff]
    %v22 = vld [vmem:[%s0 + $0x50] sm:$0xff]
    %v23 = vld [vmem:[%s0 + $0x58] sm:$0xff]
    %v24 = vld [vmem:[%s0 + $0x60] sm:$0xff]
    %v25 = vld [vmem:[%s0 + $0x68] sm:$0xff]
    %v26 = vld [vmem:[%s0 + $0x70] sm:$0xff]
    %v27 = vld [vmem:[%s0 + $0x78] sm:$0xff]
    %v28 = vlaneseq
    %v29 = vand.u32 %v28, 127
    %30 = vset.pattern.permute.xlu0 0
    %31 = vperm.xlu0 %30, %v12
    %v32 = vpop.permute.xlu0 %31
    %33 = vset.pattern.permute.xlu0 0
    %34 = vperm.xlu0 %33, %v13
    %v35 = vpop.permute.xlu0 %34
    %36 = vset.pattern.permute.xlu0 0
    %37 = vperm.xlu0 %36, %v14
    %v38 = vpop.permute.xlu0 %37
    %39 = vset.pattern.permute.xlu0 0
    %40 = vperm.xlu0 %39, %v15
    %v41 = vpop.permute.xlu0 %40
    %42 = vset.pattern.permute.xlu0 0
    %43 = vperm.xlu0 %42, %v16
    %v44 = vpop.permute.xlu0 %43
    %45 = vset.pattern.permute.xlu0 0
    %46 = vperm.xlu0 %45, %v17
    %v47 = vpop.permute.xlu0 %46
    %48 = vset.pattern.permute.xlu0 0
    %49 = vperm.xlu0 %48, %v18
    %v50 = vpop.permute.xlu0 %49
    %51 = vset.pattern.permute.xlu0 0
    %52 = vperm.xlu0 %51, %v19
    %v53 = vpop.permute.xlu0 %52
    %54 = vset.pattern.permute.xlu0 0
    %55 = vperm.xlu0 %54, %v20
    %v56 = vpop.permute.xlu0 %55
    %57 = vset.pattern.permute.xlu0 0
    %58 = vperm.xlu0 %57, %v21
    %v59 = vpop.permute.xlu0 %58
    %60 = vset.pattern.permute.xlu0 0
    %61 = vperm.xlu0 %60, %v22
    %v62 = vpop.permute.xlu0 %61
    %63 = vset.pattern.permute.xlu0 0
    %64 = vperm.xlu0 %63, %v23
    %v65 = vpop.permute.xlu0 %64
    %66 = vset.pattern.permute.xlu0 0
    %67 = vperm.xlu0 %66, %v24
    %v68 = vpop.permute.xlu0 %67
    %69 = vset.pattern.permute.xlu0 0
    %70 = vperm.xlu0 %69, %v25
    %v71 = vpop.permute.xlu0 %70
    %72 = vset.pattern.permute.xlu0 0
    %73 = vperm.xlu0 %72, %v26
    %v74 = vpop.permute.xlu0 %73
    %75 = vset.pattern.permute.xlu0 0
    %76 = vperm.xlu0 %75, %v27
    %v77 = vpop.permute.xlu0 %76
    %vm78 = vcmp.eq.s32.totalorder %v29, %v32
    %vm79 = vcmp.eq.s32.totalorder %v29, %v35
    %vm80 = vcmp.eq.s32.totalorder %v29, %v38
    %vm81 = vcmp.eq.s32.totalorder %v29, %v41
    %vm82 = vcmp.eq.s32.totalorder %v29, %v44
    %vm83 = vcmp.eq.s32.totalorder %v29, %v47
    %vm84 = vcmp.eq.s32.totalorder %v29, %v50
    %vm85 = vcmp.eq.s32.totalorder %v29, %v53
    %vm86 = vcmp.eq.s32.totalorder %v29, %v56
    %vm87 = vcmp.eq.s32.totalorder %v29, %v59
    %vm88 = vcmp.eq.s32.totalorder %v29, %v62
    %vm89 = vcmp.eq.s32.totalorder %v29, %v65
    %vm90 = vcmp.eq.s32.totalorder %v29, %v68
    %vm91 = vcmp.eq.s32.totalorder %v29, %v71
    %vm92 = vcmp.eq.s32.totalorder %v29, %v74
    %vm93 = vcmp.eq.s32.totalorder %v29, %v77
    %v94 = vsel %vm78, 1, 0
    %v95 = vsel %vm79, 1, 0
    %v96 = vsel %vm80, 1, 0
    %v97 = vsel %vm81, 1, 0
    %v98 = vsel %vm82, 1, 0
    %v99 = vsel %vm83, 1, 0
    %v100 = vsel %vm84, 1, 0
    %v101 = vsel %vm85, 1, 0
    %v102 = vsel %vm86, 1, 0
    %v103 = vsel %vm87, 1, 0
    %v104 = vsel %vm88, 1, 0
    %v105 = vsel %vm89, 1, 0
    %v106 = vsel %vm90, 1, 0
    %v107 = vsel %vm91, 1, 0
    %v108 = vsel %vm92, 1, 0
    %v109 = vsel %vm93, 1, 0
    %v110 = vcvt.s32.f32 %v94
    %v111 = vcvt.s32.f32 %v95
    %v112 = vcvt.s32.f32 %v96
    %v113 = vcvt.s32.f32 %v97
    %v114 = vcvt.s32.f32 %v98
    %v115 = vcvt.s32.f32 %v99
    %v116 = vcvt.s32.f32 %v100
    %v117 = vcvt.s32.f32 %v101
    %v118 = vcvt.s32.f32 %v102
    %v119 = vcvt.s32.f32 %v103
    %v120 = vcvt.s32.f32 %v104
    %v121 = vcvt.s32.f32 %v105
    %v122 = vcvt.s32.f32 %v106
    %v123 = vcvt.s32.f32 %v107
    %v124 = vcvt.s32.f32 %v108
    %v125 = vcvt.s32.f32 %v109
    %v126 = vld [vmem:[%s1] sm:$0xff]
    %v127 = vld [vmem:[%s1 + $0x8] sm:$0xff]
    %v128 = vld [vmem:[%s1 + $0x10] sm:$0xff]
    %v129 = vld [vmem:[%s1 + $0x18] sm:$0xff]
    %vm130 = vcmask 261120
    %v132 = vsel %vm130, %v110, 0
    %v135 = vsel %vm130, %v111, 0
    %v138 = vsel %vm130, %v112, 0
    %v141 = vsel %vm130, %v113, 0
    %v144 = vsel %vm130, %v114, 0
    %v147 = vsel %vm130, %v115, 0
    %v150 = vsel %vm130, %v116, 0
    %v153 = vsel %vm130, %v117, 0
    %v156 = vsel %vm130, %v118, 0
    %v159 = vsel %vm130, %v119, 0
    %v162 = vsel %vm130, %v120, 0
    %v165 = vsel %vm130, %v121, 0
    %v168 = vsel %vm130, %v122, 0
    %v171 = vsel %vm130, %v123, 0
    %v174 = vsel %vm130, %v124, 0
    %v177 = vsel %vm130, %v125, 0
    %179 = vmatprep.subr.mxu0 0.0
    %180 = vmatpush1.msra.mxu0 %v126
    %181 = vmatprep.subr.mxu0 0.0
    %182 = vmatpush1.msra.mxu0 %v127
    %183 = vmatprep.subr.mxu0 0.0
    %184 = vmatpush1.msra.mxu0 %v128
    %185 = vmatprep.subr.mxu0 0.0
    %186 = vmatpush1.msra.mxu0 %v129
    %187 = vmatprep.subr.mxu0 0.0
    %188 = vmatpush1.msra.mxu0 0.0
    %189 = vmatprep.subr.mxu0 0.0
    %190 = vmatpush1.msra.mxu0 0.0
    %191 = vmatprep.subr.mxu0 0.0
    %192 = vmatpush1.msra.mxu0 0.0
    %193 = vmatprep.subr.mxu0 0.0
    %194 = vmatpush1.msra.mxu0 0.0
    %195 = vmatprep.subr.mxu0 0.0
    %196 = vmatpush1.msra.mxu0 0.0
    %197 = vmatprep.subr.mxu0 0.0
    %198 = vmatpush1.msra.mxu0 0.0
    %199 = vmatprep.subr.mxu0 0.0
    %200 = vmatpush1.msra.mxu0 0.0
    %201 = vmatprep.subr.mxu0 0.0
    %202 = vmatpush1.msra.mxu0 0.0
    %203 = vmatprep.subr.mxu0 0.0
    %204 = vmatpush1.msra.mxu0 0.0
    %205 = vmatprep.subr.mxu0 0.0
    %206 = vmatpush1.msra.mxu0 0.0
    %207 = vmatprep.subr.mxu0 0.0
    %208 = vmatpush1.msra.mxu0 0.0
    %209 = vmatprep.subr.mxu0 0.0
    %210 = vmatpush1.msra.mxu0 0.0
    %211 = vmatprep.subr.mxu0 0.0
    %212 = vmatpush1.msra.mxu0 0.0
    %213 = vmatprep.subr.mxu0 0.0
    %214 = vmatpush1.msra.mxu0 0.0
    %215 = vmatprep.subr.mxu0 0.0
    %216 = vmatpush1.msra.mxu0 0.0
    %217 = vmatprep.subr.mxu0 0.0
    %218 = vmatpush1.msra.mxu0 0.0
    %219 = vmatprep.subr.mxu0 0.0
    %220 = vmatpush1.msra.mxu0 0.0
    %221 = vmatprep.subr.mxu0 0.0
    %222 = vmatpush1.msra.mxu0 0.0
    %223 = vmatprep.subr.mxu0 0.0
    %224 = vmatpush1.msra.mxu0 0.0
    %225 = vmatprep.subr.mxu0 0.0
    %226 = vmatpush1.msra.mxu0 0.0
    %227 = vmatprep.subr.mxu0 0.0
    %228 = vmatpush1.msra.mxu0 0.0
    %229 = vmatprep.subr.mxu0 0.0
    %230 = vmatpush1.msra.mxu0 0.0
    %231 = vmatprep.subr.mxu0 0.0
    %232 = vmatpush1.msra.mxu0 0.0
    %233 = vmatprep.subr.mxu0 0.0
    %234 = vmatpush1.msra.mxu0 0.0
    %235 = vmatprep.subr.mxu0 0.0
    %236 = vmatpush1.msra.mxu0 0.0
    %237 = vmatprep.subr.mxu0 0.0
    %238 = vmatpush1.msra.mxu0 0.0
    %239 = vmatprep.subr.mxu0 0.0
    %240 = vmatpush1.msra.mxu0 0.0
    %241 = vmatprep.subr.mxu0 0.0
    %242 = vmatpush1.msra.mxu0 0.0
    %243 = vmatprep.mubr.f32.mxu0 0.0
    %244 = vmatmul.mubr.f32.gmra.mrb[0].mxu0 %v132
    %v245 = vpop.f32.mrb[0].mxu0
    %v246 = vadd.f32 0.0, %v245
    %v247 = vpop.f32.mrb[0].mxu0
    %248 = vmatprep.mubr.f32.mxu0 0.0
    %249 = vmatmul.mubr.f32.gmra.mrb[0].mxu0 %v135
    %v250 = vpop.f32.mrb[0].mxu0
    %v251 = vadd.f32 0.0, %v250
    %v252 = vpop.f32.mrb[0].mxu0
    %253 = vmatprep.mubr.f32.mxu0 0.0
    %254 = vmatmul.mubr.f32.gmra.mrb[0].mxu0 %v138
    %v255 = vpop.f32.mrb[0].mxu0
    %v256 = vadd.f32 0.0, %v255
    %v257 = vpop.f32.mrb[0].mxu0
    %258 = vmatprep.mubr.f32.mxu0 0.0
    %259 = vmatmul.mubr.f32.gmra.mrb[0].mxu0 %v141
    %v260 = vpop.f32.mrb[0].mxu0
    %v261 = vadd.f32 0.0, %v260
    %v262 = vpop.f32.mrb[0].mxu0
    %263 = vmatprep.mubr.f32.mxu0 0.0
    %264 = vmatmul.mubr.f32.gmra.mrb[0].mxu0 %v144
    %v265 = vpop.f32.mrb[0].mxu0
    %v266 = vadd.f32 0.0, %v265
    %v267 = vpop.f32.mrb[0].mxu0
    %268 = vmatprep.mubr.f32.mxu0 0.0
    %269 = vmatmul.mubr.f32.gmra.mrb[0].mxu0 %v147
    %v270 = vpop.f32.mrb[0].mxu0
    %v271 = vadd.f32 0.0, %v270
    %v272 = vpop.f32.mrb[0].mxu0
    %273 = vmatprep.mubr.f32.mxu0 0.0
    %274 = vmatmul.mubr.f32.gmra.mrb[0].mxu0 %v150
    %v275 = vpop.f32.mrb[0].mxu0
    %v276 = vadd.f32 0.0, %v275
    %v277 = vpop.f32.mrb[0].mxu0
    %278 = vmatprep.mubr.f32.mxu0 0.0
    %279 = vmatmul.mubr.f32.gmra.mrb[0].mxu0 %v153
    %v280 = vpop.f32.mrb[0].mxu0
    %v281 = vadd.f32 0.0, %v280
    %v282 = vpop.f32.mrb[0].mxu0
    %283 = vmatprep.mubr.f32.mxu0 0.0
    %284 = vmatmul.mubr.f32.gmra.mrb[0].mxu0 %v156
    %v285 = vpop.f32.mrb[0].mxu0
    %v286 = vadd.f32 0.0, %v285
    %v287 = vpop.f32.mrb[0].mxu0
    %288 = vmatprep.mubr.f32.mxu0 0.0
    %289 = vmatmul.mubr.f32.gmra.mrb[0].mxu0 %v159
    %v290 = vpop.f32.mrb[0].mxu0
    %v291 = vadd.f32 0.0, %v290
    %v292 = vpop.f32.mrb[0].mxu0
    %293 = vmatprep.mubr.f32.mxu0 0.0
    %294 = vmatmul.mubr.f32.gmra.mrb[0].mxu0 %v162
    %v295 = vpop.f32.mrb[0].mxu0
    %v296 = vadd.f32 0.0, %v295
    %v297 = vpop.f32.mrb[0].mxu0
    %298 = vmatprep.mubr.f32.mxu0 0.0
    %299 = vmatmul.mubr.f32.gmra.mrb[0].mxu0 %v165
    %v300 = vpop.f32.mrb[0].mxu0
    %v301 = vadd.f32 0.0, %v300
    %v302 = vpop.f32.mrb[0].mxu0
    %303 = vmatprep.mubr.f32.mxu0 0.0
    %304 = vmatmul.mubr.f32.gmra.mrb[0].mxu0 %v168
    %v305 = vpop.f32.mrb[0].mxu0
    %v306 = vadd.f32 0.0, %v305
    %v307 = vpop.f32.mrb[0].mxu0
    %308 = vmatprep.mubr.f32.mxu0 0.0
    %309 = vmatmul.mubr.f32.gmra.mrb[0].mxu0 %v171
    %v310 = vpop.f32.mrb[0].mxu0
    %v311 = vadd.f32 0.0, %v310
    %v312 = vpop.f32.mrb[0].mxu0
    %313 = vmatprep.mubr.f32.mxu0 0.0
    %314 = vmatmul.mubr.f32.gmra.mrb[0].mxu0 %v174
    %v315 = vpop.f32.mrb[0].mxu0
    %v316 = vadd.f32 0.0, %v315
    %v317 = vpop.f32.mrb[0].mxu0
    %318 = vmatprep.mubr.f32.mxu0 0.0
    %319 = vmatmul.mubr.f32.gmra.mrb[0].mxu0 %v177
    %v320 = vpop.f32.mrb[0].mxu0
    %v321 = vadd.f32 0.0, %v320
    %v322 = vpop.f32.mrb[0].mxu0
    %323 = vdwg.mxu0
    %324 = vst [vmem:[#allocation2] sm:$0xff] %v246
    %325 = vst [vmem:[#allocation2 + $0x8] sm:$0xff] %v251
    %326 = vst [vmem:[#allocation2 + $0x10] sm:$0xff] %v256
    %327 = vst [vmem:[#allocation2 + $0x18] sm:$0xff] %v261
    %328 = vst [vmem:[#allocation2 + $0x20] sm:$0xff] %v266
    %329 = vst [vmem:[#allocation2 + $0x28] sm:$0xff] %v271
    %330 = vst [vmem:[#allocation2 + $0x30] sm:$0xff] %v276
    %331 = vst [vmem:[#allocation2 + $0x38] sm:$0xff] %v281
    %332 = vst [vmem:[#allocation2 + $0x40] sm:$0xff] %v286
    %333 = vst [vmem:[#allocation2 + $0x48] sm:$0xff] %v291
    %334 = vst [vmem:[#allocation2 + $0x50] sm:$0xff] %v296
    %335 = vst [vmem:[#allocation2 + $0x58] sm:$0xff] %v301
    %336 = vst [vmem:[#allocation2 + $0x60] sm:$0xff] %v306
    %337 = vst [vmem:[#allocation2 + $0x68] sm:$0xff] %v311
    %338 = vst [vmem:[#allocation2 + $0x70] sm:$0xff] %v316
    %339 = vst [vmem:[#allocation2 + $0x78] sm:$0xff] %v321
    // Predicated region
    $region10: #{tpu_custom_call.1} parent=1 // pred_check
      _
    $region11: #{tpu_custom_call.1} parent=1 // pred_check_branch
      %341 = sbr.rel (0) target = $region13
    $region12: #{tpu_custom_call.1} parent=1 // pred_region
      %s343 = ssub.s32 2048, 2048
      %344 = vsyncadd [#allocation3], %s343
      %s345 = sshll.u32 [#allocation2], 4
      %s346 = int_to_ptr.vmem [resolvable:$true] %s345
      %351 = dma.vmem_to_hbm [thread:$0]  %s346, 2048, %s2, [#allocation3], 128, 128, 8
    $region13: #{tpu_custom_call.1} parent=1 // pred_fallthru
      _
    // Predicated region
    $region14: #{tpu_custom_call.1} parent=1 // pred_check
      _
    $region15: #{tpu_custom_call.1} parent=1 // pred_check_branch
      %353 = sbr.rel (0) target = $region17
    $region16: #{tpu_custom_call.1} parent=1 // pred_region
      %354 = dma.done [#allocation3], 2048
    $region17: #{tpu_custom_call.1} parent=1 // pred_fallthru
      _
    %355 = vsyncpa [#allocation3], 1

</llo_original>
